<compile_context>
chip_gen: v7x
topology: tpu7x:2x2x1
jax: 0.10.0
libtpu: 0.0.40
codegen_flags: <defaults>
</compile_context>

<pallas_src>
import math
from functools import partial

import jax
import jax.numpy as jnp
from jax.experimental import pallas as pl
from jax.experimental.pallas import tpu as pltpu

BN_EPS = 1e-5


def _round_up(x, m):
    return (x + m - 1) // m * m


def _pad_axis(a, axis, target):
    if a.shape[axis] == target:
        return a
    widths = [(0, 0)] * a.ndim
    widths[axis] = (0, target - a.shape[axis])
    return jnp.pad(a, widths)


# ----------------------------------------------------------------------------
# Pallas kernel: fused  (TM,K)@(K,TN) + bias  ->  [ReLU]  -> store(o_ref.dtype)
# BN (eval) scale is pre-folded into the weight columns, so the epilogue is a
# single bias add (+ optional ReLU) in f32; the store casts to the output
# dtype (bf16 for intermediate stages, f32 for the final 1x1 conv).
# ----------------------------------------------------------------------------
def _matmul_bias_kernel(x_ref, w_ref, bias_ref, o_ref, *, apply_relu):
    acc = jnp.dot(x_ref[...], w_ref[...], preferred_element_type=jnp.float32)
    y = acc + bias_ref[...]                       # (1, TN) broadcast over rows
    if apply_relu:
        y = jnp.maximum(y, 0.0)
    o_ref[...] = y.astype(o_ref.dtype)


def fused_matmul_bias(x, w, bias, *, apply_relu, out_dtype, tm_target=4096):
    """out = [relu](x @ w + bias), tiled over rows (M) and out-channels (N).

    x: (M, K) bf16, w: (K, N) bf16, bias: (1, N) f32.  K must be a multiple of
    16 (caller zero-pads; bf16 sublane packing).  N is NOT padded: when
    N % 128 != 0 a single N tile spans the real channel count (block last dim
    == full array dim), trading masked stores for 4-16x fewer output HBM
    bytes at cout = 8..32.
    """
    M, K = x.shape
    K2, N = w.shape
    assert K == K2 and bias.shape == (1, N)
    assert K % 16 == 0, "pad K to a multiple of 16 (bf16 sublane packing)"

    # N tile: lane-dense 128-multiple when possible, otherwise the full
    # (unpadded) channel count.
    if N % 128 == 0:
        TN = next(t for t in (512, 256, 128) if N % t == 0)
    else:
        TN = N

    xbytes = jnp.dtype(x.dtype).itemsize
    wbytes = jnp.dtype(w.dtype).itemsize
    obytes = jnp.dtype(out_dtype).itemsize

    # Per-grid-step VMEM budget (everything double-buffered by the BlockSpec
    # pipeline); sized to stay inside v7x's 32 MiB scoped-VMEM default.
    budget = 24 * 1024 * 1024
    fixed = 2 * (K * TN * wbytes + TN * 4)           # weights + bias (x2 buf)
    per_row = 2 * (K * xbytes + TN * obytes)         # x row + out row (x2 buf)
    tm_cap = max(16, (budget - fixed) // max(per_row, 1))
    tm = int(min(tm_target, tm_cap))
    tm = max(16, (tm // 16) * 16)

    mp = _round_up(M, 16)
    if mp <= tm:
        # Small M: still emit >= 2 row blocks when there is enough work so the
        # "parallel" M axis shards across v7x's two TensorCores.
        tm = _round_up((mp + 1) // 2, 16) if mp >= 32 else mp
    Mp = _round_up(mp, tm)
    if Mp != M:
        x = _pad_axis(x, 0, Mp)                      # zero rows; sliced off below

    grid = (Mp // tm, N // TN)

    cost = pl.CostEstimate(
        flops=2 * Mp * K * N,
        transcendentals=0,
        bytes_accessed=int(Mp * K * xbytes + K * N * wbytes
                           + Mp * N * obytes + N * 4),
    )

    out = pl.pallas_call(
        partial(_matmul_bias_kernel, apply_relu=apply_relu),
        out_shape=jax.ShapeDtypeStruct((Mp, N), out_dtype),
        grid=grid,
        in_specs=[
            pl.BlockSpec((tm, K), lambda i, j: (i, 0)),
            pl.BlockSpec((K, TN), lambda i, j: (0, j)),
            pl.BlockSpec((1, TN), lambda i, j: (0, j)),
        ],
        out_specs=pl.BlockSpec((tm, TN), lambda i, j: (i, j)),
        compiler_params=pltpu.CompilerParams(
            dimension_semantics=("parallel", "parallel"),
            vmem_limit_bytes=32 * 1024 * 1024),
        cost_estimate=cost,
    )(x, w, bias)

    return out[:M] if Mp != M else out


# ----------------------------------------------------------------------------
# im2col glue (plain JAX): NHWC -> (B*Ho*Wo, k*k*Cin) patches  (bf16)
# ----------------------------------------------------------------------------
def im2col(x_nhwc, k, stride):
    B, H, W, C = x_nhwc.shape
    pad = k // 2
    xp = jnp.pad(x_nhwc, ((0, 0), (pad, pad), (pad, pad), (0, 0)))
    Ho = (H + 2 * pad - k) // stride + 1
    Wo = (W + 2 * pad - k) // stride + 1
    cols = []
    for di in range(k):
        for dj in range(k):
            cols.append(xp[:, di:di + stride * Ho:stride, dj:dj + stride * Wo:stride, :])
    patches = jnp.concatenate(cols, axis=-1)         # (B, Ho, Wo, k*k*C)
    return patches.reshape(B * Ho * Wo, k * k * C), Ho, Wo


# ----------------------------------------------------------------------------
# Parameter construction (deterministic, synthetic)
# ----------------------------------------------------------------------------
def make_params(key, n_filter_list, kernel_sizes):
    params = []
    for i in range(len(n_filter_list) - 1):
        cin, cout, k = n_filter_list[i], n_filter_list[i + 1], kernel_sizes[i]
        key, k1, k2, k3, k4, k5, k6 = jax.random.split(key, 7)
        fan_in = cin * k * k
        bound = 1.0 / math.sqrt(fan_in)
        params.append(dict(
            w=jax.random.uniform(k1, (cout, cin, k, k), jnp.float32, -bound, bound),
            b=jax.random.uniform(k2, (cout,), jnp.float32, -bound, bound),
            gamma=1.0 + 0.1 * jax.random.normal(k3, (cout,), jnp.float32),
            beta=0.1 * jax.random.normal(k4, (cout,), jnp.float32),
            mean=0.1 * jax.random.normal(k5, (cout,), jnp.float32),
            var=jnp.abs(jax.random.normal(k6, (cout,), jnp.float32)) + 0.5,
        ))
    c = n_filter_list[-1]
    key, k1, k2 = jax.random.split(key, 3)
    bound = 1.0 / math.sqrt(c)
    conv1x1 = dict(
        w=jax.random.uniform(k1, (c, c, 1, 1), jnp.float32, -bound, bound),
        b=jax.random.uniform(k2, (c,), jnp.float32, -bound, bound),
    )
    return params, conv1x1


# ----------------------------------------------------------------------------
# Full forward:  NCHW input -> (B, H*W, C) tokens
# ----------------------------------------------------------------------------
def convolutional_stem(x_nchw, params, conv1x1, kernel_sizes, strides, *, tm_target=4096):
    # NCHW -> NHWC once; all activations kept in bf16 between stages (the MXU
    # consumes bf16 anyway); accumulation + bias/ReLU stay f32 in-kernel.
    x = jnp.transpose(x_nchw, (0, 2, 3, 1)).astype(jnp.bfloat16)
    B = x.shape[0]

    for i, p in enumerate(params):
        k, s = kernel_sizes[i], strides[i]
        cout, cin = p["w"].shape[0], p["w"].shape[1]
        # TODO(synk): fuse the 9-tap im2col gather into the kernel (halo'd
        # input tiles / pl.ANY + manual DMA) and fuse adjacent stages with
        # activations resident in VMEM scratch to remove these HBM round trips.
        patches, Ho, Wo = im2col(x, k, s)             # (B*Ho*Wo, k*k*cin) bf16
        K = patches.shape[1]
        Kp = _round_up(K, 16)

        # Eval-mode BatchNorm folded into the conv: scale multiplied into the
        # weight columns in f32 (then bf16 cast), mean/beta/bias into shift.
        # TODO(synk): PyTorch BN in train() mode uses batch statistics; only
        # eval-mode (running stats) semantics are implemented here.
        scale = p["gamma"] / jnp.sqrt(p["var"] + BN_EPS)
        shift = ((p["b"] - p["mean"]) * scale + p["beta"]).reshape(1, cout)
        # (cout, cin, k, k) -> (k, k, cin, cout) -> (K, cout); matches patch order.
        w_mat = jnp.transpose(p["w"], (2, 3, 1, 0)).reshape(K, cout)
        w_mat = w_mat * scale[None, :]

        patches_b = _pad_axis(patches, 1, Kp).astype(jnp.bfloat16)
        w_b = _pad_axis(w_mat, 0, Kp).astype(jnp.bfloat16)

        y = fused_matmul_bias(patches_b, w_b, shift, apply_relu=True,
                              out_dtype=jnp.bfloat16, tm_target=tm_target)
        x = y.reshape(B, Ho, Wo, cout)

    # 1x1 conv = plain matmul over channels; bias-only epilogue, f32 output.
    B, H, W, C = x.shape
    Kp = _round_up(C, 16)
    w1 = conv1x1["w"].reshape(C, C).T                 # (cin, cout)
    xa = _pad_axis(x.reshape(B * H * W, C), 1, Kp).astype(jnp.bfloat16)
    w1p = _pad_axis(w1, 0, Kp).astype(jnp.bfloat16)
    bias = conv1x1["b"].reshape(1, C).astype(jnp.float32)
    y = fused_matmul_bias(xa, w1p, bias, apply_relu=False,
                          out_dtype=jnp.float32, tm_target=tm_target)
    # flatten: b c h w -> b (h w) c   (NHWC reshape gives exactly this order)
    return y.reshape(B, H * W, C)


# ----------------------------------------------------------------------------
# Pure-JAX references (lax.conv).
#   mirror_kernel=True  : reproduces the kernel's numerics (BN scale folded
#                         into bf16 weights, bf16 activations between stages,
#                         f32 accumulation) for a tight check.
#   mirror_kernel=False : the original module's full-f32 math (loose check).
# ----------------------------------------------------------------------------
def reference_stem(x_nchw, params, conv1x1, kernel_sizes, strides, *, mirror_kernel):
    dn = ("NHWC", "HWIO", "NHWC")
    x = jnp.transpose(x_nchw, (0, 2, 3, 1)).astype(jnp.float32)
    for i, p in enumerate(params):
        k, s = kernel_sizes[i], strides[i]
        w_hwio = jnp.transpose(p["w"], (2, 3, 1, 0))
        scale = p["gamma"] / jnp.sqrt(p["var"] + BN_EPS)
        pad = [(k // 2, k // 2), (k // 2, k // 2)]
        if mirror_kernel:
            w_use = (w_hwio * scale).astype(jnp.bfloat16)
            shift = (p["b"] - p["mean"]) * scale + p["beta"]
            y = jax.lax.conv_general_dilated(
                x.astype(jnp.bfloat16), w_use, (s, s), pad,
                dimension_numbers=dn, preferred_element_type=jnp.float32) + shift
            x = jnp.maximum(y, 0.0).astype(jnp.bfloat16).astype(jnp.float32)
        else:
            y = jax.lax.conv_general_dilated(
                x, w_hwio, (s, s), pad,
                dimension_numbers=dn, preferred_element_type=jnp.float32) + p["b"]
            y = (y - p["mean"]) / jnp.sqrt(p["var"] + BN_EPS) * p["gamma"] + p["beta"]
            x = jnp.maximum(y, 0.0)
    w_hwio = jnp.transpose(conv1x1["w"], (2, 3, 1, 0))
    if mirror_kernel:
        x = jax.lax.conv_general_dilated(
            x.astype(jnp.bfloat16), w_hwio.astype(jnp.bfloat16), (1, 1),
            [(0, 0), (0, 0)], dimension_numbers=dn,
            preferred_element_type=jnp.float32) + conv1x1["b"]
    else:
        x = jax.lax.conv_general_dilated(
            x, w_hwio, (1, 1), [(0, 0), (0, 0)], dimension_numbers=dn,
            preferred_element_type=jnp.float32) + conv1x1["b"]
    B, H, W, C = x.shape
    return x.reshape(B, H * W, C)


if __name__ == "__main__":
    n_filter_list = [4, 8, 16, 32, 32]
    kernel_sizes = [3, 3, 3, 3]
    strides = [2, 2, 2, 2]

    key = jax.random.PRNGKey(0)
    key, pkey, xkey = jax.random.split(key, 3)
    params, conv1x1 = make_params(pkey, n_filter_list, kernel_sizes)

    x = jax.random.normal(xkey, (2, 4, 16, 16), jnp.float32)       # NCHW like PyTorch

    out = jax.block_until_ready(
        convolutional_stem(x, params, conv1x1, kernel_sizes, strides))

    # Tight check vs. a reference that mirrors the kernel's bf16/f32 math.
    ref_tight = jax.block_until_ready(
        reference_stem(x, params, conv1x1, kernel_sizes, strides, mirror_kernel=True))
    # Loose semantics check vs. the full-f32 module math.
    ref_f32 = jax.block_until_ready(
        reference_stem(x, params, conv1x1, kernel_sizes, strides, mirror_kernel=False))

    assert out.shape == (2, 1, 32), out.shape                      # 16 -> 8 -> 4 -> 2 -> 1
    assert jnp.allclose(out, ref_tight, rtol=1e-2, atol=1e-2), \
        float(jnp.max(jnp.abs(out - ref_tight)))
    assert jnp.allclose(out, ref_f32, rtol=1.5e-1, atol=1.5e-1), \
        float(jnp.max(jnp.abs(out - ref_f32)))
    print("KERNEL_OK")
</pallas_src>

<mosaic_0001>
module attributes {stable_mosaic.version = 11 : i64} {
  func.func @_matmul_bias_kernel(%arg0: i32, %arg1: i32, %arg2: memref<64x48xbf16, #tpu.memory_space<vmem>>, %arg3: memref<48x8xbf16, #tpu.memory_space<vmem>>, %arg4: memref<1x8xf32, #tpu.memory_space<vmem>>, %arg5: memref<64x8xbf16, #tpu.memory_space<vmem>>) attributes {dimension_semantics = [#tpu.dimension_semantics<parallel>, #tpu.dimension_semantics<parallel>], iteration_bounds = array<i64: 2, 1>, scalar_prefetch = 0 : i64, scratch_operands = 0 : i64, tpu.core_type = #tpu.core_type<tc>, window_params = [{transform_indices = @transform_0, window_bounds = array<i64: 64, 48>}, {transform_indices = @transform_1, window_bounds = array<i64: 48, 8>}, {transform_indices = @transform_2, window_bounds = array<i64: 1, 8>}, {transform_indices = @transform_3, window_bounds = array<i64: 64, 8>}]} {
    %c0 = arith.constant 0 : index
    %c0_0 = arith.constant 0 : index
    %0 = vector.load %arg2[%c0, %c0_0] : memref<64x48xbf16, #tpu.memory_space<vmem>>, vector<64x48xbf16>
    %c0_1 = arith.constant 0 : index
    %c0_2 = arith.constant 0 : index
    %1 = vector.load %arg3[%c0_1, %c0_2] : memref<48x8xbf16, #tpu.memory_space<vmem>>, vector<48x8xbf16>
    %cst = arith.constant dense<0.000000e+00> : vector<64x8xf32>
    %2 = tpu.matmul %0, %1, %cst {dimension_numbers = #tpu.dot_dimension_numbers<[1], [0], [0], [1], [0, 0, 1, 1], [], []>} : vector<64x48xbf16>, vector<48x8xbf16>, vector<64x8xf32> -> vector<64x8xf32>
    %c0_3 = arith.constant 0 : index
    %c0_4 = arith.constant 0 : index
    %3 = vector.load %arg4[%c0_3, %c0_4] : memref<1x8xf32, #tpu.memory_space<vmem>>, vector<1x8xf32>
    %4 = vector.broadcast %3 : vector<1x8xf32> to vector<64x8xf32>
    %5 = arith.addf %2, %4 : vector<64x8xf32>
    %cst_5 = arith.constant 0.000000e+00 : f32
    %6 = vector.broadcast %cst_5 : f32 to vector<64x8xf32>
    %7 = arith.maximumf %5, %6 : vector<64x8xf32>
    %8 = arith.truncf %7 : vector<64x8xf32> to vector<64x8xbf16>
    %c0_6 = arith.constant 0 : index
    %c0_7 = arith.constant 0 : index
    %9 = vector.load %arg5[%c0_6, %c0_7] : memref<64x8xbf16, #tpu.memory_space<vmem>>, vector<64x8xbf16>
    tpu.vector_store %arg5[%c0_6, %c0_7], %8 {strides = array<i32>} : memref<64x8xbf16, #tpu.memory_space<vmem>>, vector<64x8xbf16>,
    return
  }
  func.func @transform_0(%arg0: i32, %arg1: i32) -> (i32, i32) {
    %c0_i32 = arith.constant 0 : i32
    %c0_i32_0 = arith.constant 0 : i32
    return %arg0, %c0_i32 : i32, i32
  }
  func.func @transform_1(%arg0: i32, %arg1: i32) -> (i32, i32) {
    %c0_i32 = arith.constant 0 : i32
    %c0_i32_0 = arith.constant 0 : i32
    return %c0_i32, %arg1 : i32, i32
  }
  func.func @transform_2(%arg0: i32, %arg1: i32) -> (i32, i32) {
    %c0_i32 = arith.constant 0 : i32
    %c0_i32_0 = arith.constant 0 : i32
    return %c0_i32, %arg1 : i32, i32
  }
  func.func @transform_3(%arg0: i32, %arg1: i32) -> (i32, i32) {
    %c0_i32 = arith.constant 0 : i32
    return %arg0, %arg1 : i32, i32
  }
}

</mosaic_0001>

<llo_original>
// kernel: tpu_custom_call.1
$region0: #{tpu_custom_call.1}
  #allocation0 [shape = 'u32[]', space=smem, size = 0x4, offset = 0x4, fixed_abs, tag = 'smem constant byte address 0x4 - core index']
  #allocation1 [shape = 'u32[144,128]{1,0:T(1,128)}', space=vmem, size = 0x12000, scoped, tag = 'internal scratch']
  %s0 = inlined_call_operand.vmem [shape: bf16[128,48], index: 0, kind: input, shape index: {}]
  %s1 = inlined_call_operand.vmem [shape: bf16[48,8], index: 1, kind: input, shape index: {}]
  %s2 = inlined_call_operand.vmem [shape: f32[1,8], index: 2, kind: input, shape index: {}]
  %s3 = inlined_call_operand.vmem [shape: bf16[128,8], index: 3, kind: output, shape index: {}]
  %s4 = sld [smem:[#allocation0]]
  $region45: #{tpu_custom_call.1} parent=0
    _
  %s6 = ssub.s32 1, %s4
  %s7 = scalar_select 0, %s6, %s4
  loop: start=0, step=1, limit=4
  $region2: #{tpu_custom_call.1} parent=0 // loop_pre_header
    _
  $region3: #{tpu_custom_call.1} parent=0 // loop_header
    %s9 = sphi 0, %s13
    %p10 = scmp.ge.s32.totalorder %s9, 4
    %s16 = sphi 0, %s28
    %s17 = sphi 0, %s24
    %s18 = sphi 0, %s16
    %s19 = sphi 0, %s17
    %s20 = sphi 0, %s18
    %s21 = sphi 0, %s19
    %s31 = sphi 0, %s33
    %s34 = sphi 0, %s31
    %s35 = sphi 0, %s34
    %s51 = sphi 0, %s35
    %s57 = sphi 0, %s59
    %s60 = sphi 0, %s57
    %s61 = sphi 0, %s60
    %s77 = sphi 0, %s61
    %s83 = sphi 0, %s85
    %s86 = sphi 0, %s83
    %s87 = sphi 0, %s86
    %s103 = sphi 0, %s87
    %s111 = sphi 0, %s113
    %s114 = sphi 0, %s111
    %s115 = sphi 0, %s114
    %s131 = sphi 0, %s115
  $region4: #{tpu_custom_call.1} parent=0 // loop_header_branch
    %12 = sbr.rel (%p10) target = $region8
  $region5: #{tpu_custom_call.1} parent=0 // loop_body
    %s14 = ssub.s32 %s9, 1
    %s15 = ssub.s32 %s9, 2
    %s22 = sadd.s32 1, %s17
    %p23 = scmp.ge.s32.totalorder %s22, 1
    %s24 = scalar_select %p23, 0, %s22
    %s25 = sadd.s32 1, %s16
    %s26 = scalar_select %p23, %s25, %s16
    %p27 = scmp.ge.s32.totalorder %s26, 2
    %s28 = scalar_select %p27, 0, %s26
    %s29 = ssub.s32 %s16, %s28
    %p30 = scmp.eq.s32.totalorder %s29, 0
    %s32 = sadd.s32 %s31, 1
    %s33 = scalar_select %p30, %s31, %s32
    %p36 = pneg %p30
    %p37 = scmp.eq.s32.totalorder %s9, 1
    %p38 = por %p36, %p37
    %p39 = scmp.ne.s32.totalorder %s31, %s34
    %p40 = scmp.eq.s32.totalorder %s9, 0
    %p41 = por %p39, %p40
    %p42 = scmp.ne.s32.totalorder %s31, %s34
    %p43 = scmp.eq.s32.totalorder %s14, 1
    %p44 = por %p42, %p43
    %p45 = scmp.ne.s32.totalorder %s34, %s35
    %p46 = scmp.eq.s32.totalorder %s14, 0
    %p47 = por %p45, %p46
    %p48 = scmp.ne.s32.totalorder %s34, %s35
    %p49 = scmp.eq.s32.totalorder %s15, 1
    %p50 = por %p48, %p49
    %p52 = scmp.ne.s32.totalorder %s35, %s51
    %p53 = scmp.eq.s32.totalorder %s15, 0
    %p54 = por %p52, %p53
    %s55 = ssub.s32 %s17, %s24
    %p56 = scmp.eq.s32.totalorder %s55, 0
    %s58 = sadd.s32 %s57, 1
    %s59 = scalar_select %p56, %s57, %s58
    %p62 = pneg %p56
    %p63 = scmp.eq.s32.totalorder %s9, 1
    %p64 = por %p62, %p63
    %p65 = scmp.ne.s32.totalorder %s57, %s60
    %p66 = scmp.eq.s32.totalorder %s9, 0
    %p67 = por %p65, %p66
    %p68 = scmp.ne.s32.totalorder %s57, %s60
    %p69 = scmp.eq.s32.totalorder %s14, 1
    %p70 = por %p68, %p69
    %p71 = scmp.ne.s32.totalorder %s60, %s61
    %p72 = scmp.eq.s32.totalorder %s14, 0
    %p73 = por %p71, %p72
    %p74 = scmp.ne.s32.totalorder %s60, %s61
    %p75 = scmp.eq.s32.totalorder %s15, 1
    %p76 = por %p74, %p75
    %p78 = scmp.ne.s32.totalorder %s61, %s77
    %p79 = scmp.eq.s32.totalorder %s15, 0
    %p80 = por %p78, %p79
    %s81 = ssub.s32 %s17, %s24
    %p82 = scmp.eq.s32.totalorder %s81, 0
    %s84 = sadd.s32 %s83, 1
    %s85 = scalar_select %p82, %s83, %s84
    %p88 = pneg %p82
    %p89 = scmp.eq.s32.totalorder %s9, 1
    %p90 = por %p88, %p89
    %p91 = scmp.ne.s32.totalorder %s83, %s86
    %p92 = scmp.eq.s32.totalorder %s9, 0
    %p93 = por %p91, %p92
    %p94 = scmp.ne.s32.totalorder %s83, %s86
    %p95 = scmp.eq.s32.totalorder %s14, 1
    %p96 = por %p94, %p95
    %p97 = scmp.ne.s32.totalorder %s86, %s87
    %p98 = scmp.eq.s32.totalorder %s14, 0
    %p99 = por %p97, %p98
    %p100 = scmp.ne.s32.totalorder %s86, %s87
    %p101 = scmp.eq.s32.totalorder %s15, 1
    %p102 = por %p100, %p101
    %p104 = scmp.ne.s32.totalorder %s87, %s103
    %p105 = scmp.eq.s32.totalorder %s15, 0
    %p106 = por %p104, %p105
    %s107 = ssub.s32 %s16, %s28
    %s108 = ssub.s32 %s17, %s24
    %s109 = sor.u32 %s107, %s108
    %p110 = scmp.eq.s32.totalorder %s109, 0
    %s112 = sadd.s32 %s111, 1
    %s113 = scalar_select %p110, %s111, %s112
    %p116 = pneg %p110
    %p117 = scmp.eq.s32.totalorder %s9, 1
    %p118 = por %p116, %p117
    %p119 = scmp.ne.s32.totalorder %s111, %s114
    %p120 = scmp.eq.s32.totalorder %s9, 0
    %p121 = por %p119, %p120
    %p122 = scmp.ne.s32.totalorder %s111, %s114
    %p123 = scmp.eq.s32.totalorder %s14, 1
    %p124 = por %p122, %p123
    %p125 = scmp.ne.s32.totalorder %s114, %s115
    %p126 = scmp.eq.s32.totalorder %s14, 0
    %p127 = por %p125, %p126
    %p128 = scmp.ne.s32.totalorder %s114, %s115
    %p129 = scmp.eq.s32.totalorder %s15, 1
    %p130 = por %p128, %p129
    %p132 = scmp.ne.s32.totalorder %s115, %s131
    %p133 = scmp.eq.s32.totalorder %s15, 0
    %p134 = por %p132, %p133
    %p135 = scmp.le.s32.totalorder 1, %s9
    %p136 = scmp.lt.s32.totalorder %s9, 3
    %p137 = pnand %p135, %p136
    %p138 = pneg %p137
    // Predicated region
    $region9: #{tpu_custom_call.1} parent=5 // pred_check
      _
    $region10: #{tpu_custom_call.1} parent=5 // pred_check_branch
      %140 = sbr.rel (%p137) target = $region12
    $region11: #{tpu_custom_call.1} parent=5 // pred_region
      %s141 = ssub.s32 %s9, 1
      // Predicated region
      $region13: #{tpu_custom_call.1} parent=11 // pred_check
        %p142 = pneg %p73
      $region14: #{tpu_custom_call.1} parent=11 // pred_check_branch
        %144 = sbr.rel (%p142) target = $region16
      $region15: #{tpu_custom_call.1} parent=11 // pred_region
        %p145 = scmp.lt.s32.totalorder %s19, 0
        %s146 = scalar_select %p145, %s19, 0
        %s147 = smul.addr %s146, 4
        %s148 = scalar_lea.vmem %s1, %s147
      $region16: #{tpu_custom_call.1} parent=11 // pred_fallthru
        _
      // Predicated region
      $region17: #{tpu_custom_call.1} parent=11 // pred_check
        %p149 = pneg %p99
      $region18: #{tpu_custom_call.1} parent=11 // pred_check_branch
        %151 = sbr.rel (%p149) target = $region20
      $region19: #{tpu_custom_call.1} parent=11 // pred_region
        %p152 = scmp.lt.s32.totalorder %s19, 0
        %s153 = scalar_select %p152, %s19, 0
        %s154 = scalar_lea.vmem %s2, %s153
      $region20: #{tpu_custom_call.1} parent=11 // pred_fallthru
        _
    $region12: #{tpu_custom_call.1} parent=5 // pred_fallthru
      _
    %p155 = scmp.lt.s32.totalorder %s9, 2
    // Predicated region
    $region21: #{tpu_custom_call.1} parent=5 // pred_check
      %p156 = pneg %p155
    $region22: #{tpu_custom_call.1} parent=5 // pred_check_branch
      %158 = sbr.rel (%p156) target = $region24
    $region23: #{tpu_custom_call.1} parent=5 // pred_region
      // Predicated region
      $region25: #{tpu_custom_call.1} parent=23 // pred_check
        %p159 = pneg %p41
      $region26: #{tpu_custom_call.1} parent=23 // pred_check_branch
        %161 = sbr.rel (%p159) target = $region28
      $region27: #{tpu_custom_call.1} parent=23 // pred_region
        %s162 = smul.u32 8, %s16
        %p163 = scmp.lt.s32.totalorder %s162, 15
        %s164 = scalar_select %p163, %s162, 15
        %s165 = smul.addr %s164, 4
        %s166 = scalar_lea.vmem %s0, %s165
        %s167 = smul.u32 8, %s16
      $region28: #{tpu_custom_call.1} parent=23 // pred_fallthru
        _
    $region24: #{tpu_custom_call.1} parent=5 // pred_fallthru
      _
    %p168 = scmp.le.s32.totalorder 1, %s9
    %p169 = scmp.lt.s32.totalorder %s9, 3
    %p170 = pnand %p168, %p169
    %p171 = pneg %p170
    // Predicated region
    $region29: #{tpu_custom_call.1} parent=5 // pred_check
      _
    $region30: #{tpu_custom_call.1} parent=5 // pred_check_branch
      %173 = sbr.rel (%p170) target = $region32
    $region31: #{tpu_custom_call.1} parent=5 // pred_region
      %s174 = ssub.s32 %s9, 1
      %s175 = smul.u32 8, %s18
      %p176 = scmp.lt.s32.totalorder %s175, 15
      %s177 = scalar_select %p176, %s175, 15
      %s178 = smul.addr %s177, 4
      %s179 = scalar_lea.vmem %s0, %s178
      %p180 = pneg %p47
      %p181 = pneg %p44
      %p182 = scmp.lt.s32.totalorder %s19, 0
      %s183 = scalar_select %p182, %s19, 0
      %s184 = smul.addr %s183, 4
      %s185 = scalar_lea.vmem %s1, %s184
      %p186 = pneg %p73
      %p187 = pneg %p70
      %p188 = scmp.lt.s32.totalorder %s19, 0
      %s189 = scalar_select %p188, %s19, 0
      %s190 = scalar_lea.vmem %s2, %s189
      %p191 = pneg %p99
      %p192 = pneg %p96
      %p193 = pneg %p127
      %p194 = pneg %p124
      %s195 = smul.u32 8, %s18
      %p196 = scmp.lt.s32.totalorder %s195, 15
      %s197 = scalar_select %p196, %s195, 15
      %p198 = scmp.lt.s32.totalorder %s19, 0
      %s199 = scalar_select %p198, %s19, 0
      %s200 = sadd.s32 %s199, %s197
      %s201 = smul.addr %s200, 4
      %s202 = scalar_lea.vmem %s3, %s201
      %s203 = smul.u32 8, %s18
      %p204 = scmp.lt.s32.totalorder %s203, 15
      %s205 = scalar_select %p204, %s203, 15
      %s206 = smul.addr %s205, 4
      %s207 = scalar_lea.vmem %s0, %s206
      %s208 = smul.u32 8, %s18
      %p209 = scmp.lt.s32.totalorder %s19, 0
      %s210 = scalar_select %p209, %s19, 0
      %s211 = smul.addr %s210, 4
      %s212 = scalar_lea.vmem %s1, %s211
      %p213 = scmp.lt.s32.totalorder %s19, 0
      %s214 = scalar_select %p213, %s19, 0
      %s215 = scalar_lea.vmem %s2, %s214
      %s216 = smul.u32 8, %s18
      %p217 = scmp.lt.s32.totalorder %s216, 15
      %s218 = scalar_select %p217, %s216, 15
      %p219 = scmp.lt.s32.totalorder %s19, 0
      %s220 = scalar_select %p219, %s19, 0
      %s221 = sadd.s32 %s220, %s218
      %s222 = smul.addr %s221, 4
      %s223 = scalar_lea.vmem %s3, %s222
      %s224 = smul.u32 8, %s18
      %v226 = vld [vmem:[%s207] sm:$0xf]
      %v227 = vld [vmem:[%s207 + $0x4] sm:$0xf]
      %v228 = vld [vmem:[%s207 + $0x8] sm:$0xf]
      %v229 = vld [vmem:[%s207 + $0xc] sm:$0xf]
      %v230 = vld [vmem:[%s207 + $0x10] sm:$0xf]
      %v231 = vld [vmem:[%s207 + $0x14] sm:$0xf]
      %v232 = vld [vmem:[%s207 + $0x18] sm:$0xf]
      %v233 = vld [vmem:[%s207 + $0x1c] sm:$0xf]
      %v234 = vld [vmem:[%s212] sm:$0xf]
      %v235 = vld [vmem:[%s212 + $0x4] sm:$0xf]
      %v236 = vld [vmem:[%s212 + $0x8] sm:$0xf]
      %v237 = vld [vmem:[%s212 + $0xc] sm:$0xf]
      %v238 = vld [vmem:[%s212 + $0x10] sm:$0xf]
      %v239 = vld [vmem:[%s212 + $0x14] sm:$0xf]
      %v240 = vld [vmem:[%s215] sm:$0x1]
      %v242 = vlaneseq
      %v243 = vshrl.u32 %v242, 7
      %v244 = vsub.s32 0, %v243
      %v245 = vrot.slane %v240, %v244
      %v255 = vunpack.c.l.b16 %v226
      %v256 = vunpack.c.l.b16 %v227
      %v257 = vunpack.c.l.b16 %v228
      %v258 = vunpack.c.l.b16 %v229
      %v259 = vunpack.c.l.b16 %v230
      %v260 = vunpack.c.l.b16 %v231
      %v261 = vunpack.c.l.b16 %v232
      %v262 = vunpack.c.l.b16 %v233
      %v263 = vpack.c.b16 %v256, %v255
      %v264 = vpack.c.b16 %v258, %v257
      %v265 = vpack.c.b16 %v260, %v259
      %v266 = vpack.c.b16 %v262, %v261
      %v273 = vunpack.c.l.b16 %v234
      %v274 = vunpack.c.l.b16 %v235
      %v275 = vunpack.c.l.b16 %v236
      %v276 = vunpack.c.l.b16 %v237
      %v277 = vunpack.c.l.b16 %v238
      %v278 = vunpack.c.l.b16 %v239
      %v279 = vpack.c.b16 %v274, %v273
      %v280 = vpack.c.b16 %v276, %v275
      %v281 = vpack.c.b16 %v278, %v277
      %vm285 = vcmask 392192
      %v287 = vsel %vm285, %v263, 0
      %v290 = vsel %vm285, %v264, 0
      %v293 = vsel %vm285, %v265, 0
      %v296 = vsel %vm285, %v266, 0
      %298 = vmatprep.subr.bf16.mxu0 0
      %299 = vmatpush1.bf16.msra.mxu0 %v279
      %300 = vmatprep.subr.bf16.mxu0 0
      %301 = vmatpush1.bf16.msra.mxu0 %v280
      %302 = vmatprep.subr.bf16.mxu0 0
      %303 = vmatpush1.bf16.msra.mxu0 %v281
      %304 = vmatprep.subr.bf16.mxu0 0
      %305 = vmatpush1.bf16.msra.mxu0 0
      %306 = vmatprep.subr.bf16.mxu0 0
      %307 = vmatpush1.bf16.msra.mxu0 0
      %308 = vmatprep.subr.bf16.mxu0 0
      %309 = vmatpush1.bf16.msra.mxu0 0
      %310 = vmatprep.subr.bf16.mxu0 0
      %311 = vmatpush1.bf16.msra.mxu0 0
      %312 = vmatprep.subr.bf16.mxu0 0
      %313 = vmatpush1.bf16.msra.mxu0 0
      %314 = vmatprep.subr.bf16.mxu0 0
      %315 = vmatpush1.bf16.msra.mxu0 0
      %316 = vmatprep.subr.bf16.mxu0 0
      %317 = vmatpush1.bf16.msra.mxu0 0
      %318 = vmatprep.subr.bf16.mxu0 0
      %319 = vmatpush1.bf16.msra.mxu0 0
      %320 = vmatprep.subr.bf16.mxu0 0
      %321 = vmatpush1.bf16.msra.mxu0 0
      %322 = vmatprep.subr.bf16.mxu0 0
      %323 = vmatpush1.bf16.msra.mxu0 0
      %324 = vmatprep.subr.bf16.mxu0 0
      %325 = vmatpush1.bf16.msra.mxu0 0
      %326 = vmatprep.subr.bf16.mxu0 0
      %327 = vmatpush1.bf16.msra.mxu0 0
      %328 = vmatprep.subr.bf16.mxu0 0
      %329 = vmatpush1.bf16.msra.mxu0 0
      %330 = vmatprep.mubr.bf16.mxu0 0
      %331 = vmatmul.mubr.bf16.gmra.mrb[0].mxu0 %v287
      %v332 = vpop.f32.mrb[0].mxu0
      %v333 = vadd.f32 %v245, %v332
      %v334 = vpop.f32.mrb[0].mxu0
      %v335 = vpop.f32.mrb[0].mxu0
      %v336 = vadd.f32 %v245, %v335
      %v337 = vpop.f32.mrb[0].mxu0
      %338 = vmatprep.mubr.bf16.mxu0 0
      %339 = vmatmul.mubr.bf16.gmra.mrb[0].mxu0 %v290
      %v340 = vpop.f32.mrb[0].mxu0
      %v341 = vadd.f32 %v245, %v340
      %v342 = vpop.f32.mrb[0].mxu0
      %v343 = vpop.f32.mrb[0].mxu0
      %v344 = vadd.f32 %v245, %v343
      %v345 = vpop.f32.mrb[0].mxu0
      %346 = vmatprep.mubr.bf16.mxu0 0
      %347 = vmatmul.mubr.bf16.gmra.mrb[0].mxu0 %v293
      %v348 = vpop.f32.mrb[0].mxu0
      %v349 = vadd.f32 %v245, %v348
      %v350 = vpop.f32.mrb[0].mxu0
      %v351 = vpop.f32.mrb[0].mxu0
      %v352 = vadd.f32 %v245, %v351
      %v353 = vpop.f32.mrb[0].mxu0
      %354 = vmatprep.mubr.bf16.mxu0 0
      %355 = vmatmul.mubr.bf16.gmra.mrb[0].mxu0 %v296
      %v356 = vpop.f32.mrb[0].mxu0
      %v357 = vadd.f32 %v245, %v356
      %v358 = vpop.f32.mrb[0].mxu0
      %v359 = vpop.f32.mrb[0].mxu0
      %v360 = vadd.f32 %v245, %v359
      %v361 = vpop.f32.mrb[0].mxu0
      %362 = vdwg.mxu0
      %v363 = vmax.f32 %v333, 0.0
      %v364 = vmax.f32 %v336, 0.0
      %v365 = vmax.f32 %v341, 0.0
      %v366 = vmax.f32 %v344, 0.0
      %v367 = vmax.f32 %v349, 0.0
      %v368 = vmax.f32 %v352, 0.0
      %v369 = vmax.f32 %v357, 0.0
      %v370 = vmax.f32 %v360, 0.0
      %v371 = vpack.c.bf16 %v364, %v363
      %v372 = vpack.c.bf16 %v366, %v365
      %v373 = vpack.c.bf16 %v368, %v367
      %v374 = vpack.c.bf16 %v370, %v369
      %v379 = vunpack.c.l.b16 %v371
      %v380 = vunpack.c.h.b16 %v371
      %v381 = vunpack.c.l.b16 %v372
      %v382 = vunpack.c.h.b16 %v372
      %v383 = vunpack.c.l.b16 %v373
      %v384 = vunpack.c.h.b16 %v373
      %v385 = vunpack.c.l.b16 %v374
      %v386 = vunpack.c.h.b16 %v374
      %v387 = vpack.c.b16 %v379, %v379
      %v388 = vpack.c.b16 %v380, %v380
      %v389 = vpack.c.b16 %v381, %v381
      %v390 = vpack.c.b16 %v382, %v382
      %v391 = vpack.c.b16 %v383, %v383
      %v392 = vpack.c.b16 %v384, %v384
      %v393 = vpack.c.b16 %v385, %v385
      %v394 = vpack.c.b16 %v386, %v386
      %vm403 = vcmask 60416
      %404 = vst.msk [vmem:[%s223] sm:$0xf] %vm403, %v387
      %405 = vst.msk [vmem:[%s223 + $0x4] sm:$0xf] %vm403, %v388
      %406 = vst.msk [vmem:[%s223 + $0x8] sm:$0xf] %vm403, %v389
      %407 = vst.msk [vmem:[%s223 + $0xc] sm:$0xf] %vm403, %v390
      %408 = vst.msk [vmem:[%s223 + $0x10] sm:$0xf] %vm403, %v391
      %409 = vst.msk [vmem:[%s223 + $0x14] sm:$0xf] %vm403, %v392
      %410 = vst.msk [vmem:[%s223 + $0x18] sm:$0xf] %vm403, %v393
      %411 = vst.msk [vmem:[%s223 + $0x1c] sm:$0xf] %vm403, %v394
      %s412 = smul.u32 8, %s18
      %p413 = scmp.lt.s32.totalorder %s412, 15
      %s414 = scalar_select %p413, %s412, 15
      %p415 = scmp.lt.s32.totalorder %s19, 0
      %s416 = scalar_select %p415, %s19, 0
      %s417 = sadd.s32 %s416, %s414
      %s418 = smul.addr %s417, 4
      %s419 = scalar_lea.vmem %s3, %s418
      // Predicated region
      $region33: #{tpu_custom_call.1} parent=31 // pred_check
        %p420 = pneg %p124
      $region34: #{tpu_custom_call.1} parent=31 // pred_check_branch
        %422 = sbr.rel (%p420) target = $region36
      $region35: #{tpu_custom_call.1} parent=31 // pred_region
        %s423 = smul.u32 8, %s18
      $region36: #{tpu_custom_call.1} parent=31 // pred_fallthru
        _
    $region32: #{tpu_custom_call.1} parent=5 // pred_fallthru
      _
    %p424 = scmp.le.s32.totalorder 2, %s9
    // Predicated region
    $region37: #{tpu_custom_call.1} parent=5 // pred_check
      %p425 = pneg %p424
    $region38: #{tpu_custom_call.1} parent=5 // pred_check_branch
      %427 = sbr.rel (%p425) target = $region40
    $region39: #{tpu_custom_call.1} parent=5 // pred_region
      %s428 = ssub.s32 %s9, 2
      // Predicated region
      $region41: #{tpu_custom_call.1} parent=39 // pred_check
        %p429 = pneg %p130
      $region42: #{tpu_custom_call.1} parent=39 // pred_check_branch
        %431 = sbr.rel (%p429) target = $region44
      $region43: #{tpu_custom_call.1} parent=39 // pred_region
        %s432 = smul.u32 8, %s20
        %p433 = scmp.lt.s32.totalorder %s432, 15
        %s434 = scalar_select %p433, %s432, 15
        %p435 = scmp.lt.s32.totalorder %s21, 0
        %s436 = scalar_select %p435, %s21, 0
        %s437 = sadd.s32 %s436, %s434
        %s438 = smul.addr %s437, 4
        %s439 = scalar_lea.vmem %s3, %s438
      $region44: #{tpu_custom_call.1} parent=39 // pred_fallthru
        _
    $region40: #{tpu_custom_call.1} parent=5 // pred_fallthru
      _
  $region6: #{tpu_custom_call.1} parent=0 // loop_footer
    %s13 = sadd.s32 1, %s9
  $region7: #{tpu_custom_call.1} parent=0 // loop_footer_branch
    %8 = sbr.rel target = $region3
  $region8: #{tpu_custom_call.1} parent=0 // loop_exit
    _

</llo_original>
